<compile_context>
chip_gen: v7x
topology: tpu7x:2x2x1
jax: 0.10.0
libtpu: 0.0.40
codegen_flags: <defaults>
</compile_context>

<pallas_src>
import functools
import math

import jax
import jax.numpy as jnp
from jax.experimental import pallas as pl
from jax.experimental.pallas import tpu as pltpu

LANES = 128
MAX_BLK_ROWS = 1024  # 1024 x 128 f32 tile = 512 KiB per stream; 6 streams,
                     # double-buffered -> ~6 MiB VMEM: safe on v5e/v6e/v7x.


def _dropedge_kernel(keep_rate, thresh_u32,
                     scalars_ref,                       # SMEM prefetch: [seed, E]
                     vals_ref, rows_ref, cols_ref,      # inputs (VMEM tiles)
                     newvals_ref, newrows_ref, newcols_ref):  # outputs
    blk_rows, lanes = vals_ref.shape
    seed = scalars_ref[0]
    n_edges = scalars_ref[1]

    # Absolute edge index of each slot in this tile (row-major, lanes fast).
    base = pl.program_id(0) * (blk_rows * lanes)
    row_iota = jax.lax.broadcasted_iota(jnp.int32, (blk_rows, lanes), 0)
    lane_iota = jax.lax.broadcasted_iota(jnp.int32, (blk_rows, lanes), 1)
    gidx = base + row_iota * lanes + lane_iota
    valid = gidx < n_edges  # kill padded slots (no separate `valid` stream)

    if keep_rate >= 1.0:
        keep = valid
    else:
        # Stateless counter-based PRNG: murmur3 fmix32 of (edge index, seed).
        # Tiling-invariant and backend-portable (plain integer VALU ops).
        x = gidx.astype(jnp.uint32) + seed.astype(jnp.uint32) * jnp.uint32(0x9E3779B9)
        x = x ^ (x >> 16)
        x = x * jnp.uint32(0x85EBCA6B)
        x = x ^ (x >> 13)
        x = x * jnp.uint32(0xC2B2AE35)
        x = x ^ (x >> 16)
        # keep edge with probability keepRate: single integer threshold compare
        # (equivalent to floor(u + keepRate).bool() on uniform u in [0,1)).
        keep = jnp.logical_and(x < jnp.uint32(thresh_u32), valid)

    inv_keep = jnp.float32(1.0 / keep_rate)
    newvals_ref[...] = jnp.where(keep, vals_ref[...] * inv_keep, 0.0)
    # Dropped / padded slots get index -1 (adjacency indices are always >= 0),
    # so the keep mask is reconstructed in the wrapper as `newrows >= 0`.
    newrows_ref[...] = jnp.where(keep, rows_ref[...], -1)
    newcols_ref[...] = jnp.where(keep, cols_ref[...], -1)


def sp_adj_drop_edge(idxs, vals, keep_rate, seed, dense_shape):
    """idxs: int32[2, E], vals: f32[E].  Returns (new_idxs[2, E], new_vals[E],
    n_kept, dense_shape); only the first n_kept entries are valid edges."""
    keep_rate = float(keep_rate)  # static hyperparameter (nn.Module attribute)
    if not (0.0 < keep_rate):
        raise ValueError("keepRate must be > 0")
    thresh_u32 = min(int(keep_rate * 4294967296.0), 0xFFFFFFFF)

    E = vals.shape[0]
    n_rows_needed = max(1, math.ceil(E / LANES))
    blk_rows = min(MAX_BLK_ROWS, max(8, ((n_rows_needed + 7) // 8) * 8))
    n_rows = math.ceil(n_rows_needed / blk_rows) * blk_rows
    E_pad = n_rows * LANES
    pad = E_pad - E
    grid = n_rows // blk_rows

    vals_p = jnp.pad(vals.astype(jnp.float32), (0, pad)).reshape(n_rows, LANES)
    rows_p = jnp.pad(idxs[0].astype(jnp.int32), (0, pad)).reshape(n_rows, LANES)
    cols_p = jnp.pad(idxs[1].astype(jnp.int32), (0, pad)).reshape(n_rows, LANES)

    tile = pl.BlockSpec((blk_rows, LANES), lambda i, s: (i, 0))
    kernel = functools.partial(_dropedge_kernel, keep_rate, thresh_u32)

    out_shapes = (
        jax.ShapeDtypeStruct((n_rows, LANES), jnp.float32),  # new vals
        jax.ShapeDtypeStruct((n_rows, LANES), jnp.int32),    # new rows
        jax.ShapeDtypeStruct((n_rows, LANES), jnp.int32),    # new cols
    )

    scalars = jnp.asarray([seed, E], dtype=jnp.int32)

    newvals, newrows, newcols = pl.pallas_call(
        kernel,
        out_shape=out_shapes,
        grid_spec=pltpu.PrefetchScalarGridSpec(
            num_scalar_prefetch=1,
            grid=(grid,),
            in_specs=[tile, tile, tile],
            out_specs=[tile, tile, tile],
        ),
        compiler_params=pltpu.CompilerParams(
            dimension_semantics=("parallel",)),  # tiles independent -> megacore
    )(scalars, vals_p, rows_p, cols_p)

    # ---- glue: emulate boolean-mask compaction with static shapes ----------
    # TODO(synk): true shape-shrinking compaction (vals[mask]) is data-dependent
    # and has no static-shape Pallas/XLA equivalent; kept edges are moved to the
    # front with an O(E) stable partition and n_kept reports how many are valid.
    nv = newvals.reshape(-1)[:E]
    nr = newrows.reshape(-1)[:E]
    nc = newcols.reshape(-1)[:E]
    mask_f = nr >= 0
    n_kept = mask_f.sum()
    kept_pos = jnp.cumsum(mask_f) - 1
    drop_pos = n_kept + jnp.cumsum(jnp.logical_not(mask_f)) - 1
    dst = jnp.where(mask_f, kept_pos, drop_pos).astype(jnp.int32)
    new_vals = jnp.zeros_like(nv).at[dst].set(nv)
    new_rows = jnp.full_like(nr, -1).at[dst].set(nr)
    new_cols = jnp.full_like(nc, -1).at[dst].set(nc)
    new_idxs = jnp.stack([new_rows, new_cols])
    return new_idxs, new_vals, n_kept, dense_shape


if __name__ == "__main__":
    key = jax.random.PRNGKey(0)
    k1, k2, k3 = jax.random.split(key, 3)

    # Small synthetic sparse adjacency: 16x16 nodes, 40 edges.
    num_nodes = 16
    E = 40
    rows = jax.random.randint(k1, (E,), 0, num_nodes, dtype=jnp.int32)
    cols = jax.random.randint(k2, (E,), 0, num_nodes, dtype=jnp.int32)
    idxs = jnp.stack([rows, cols])                          # [2, E]
    vals = jax.random.uniform(k3, (E,), dtype=jnp.float32)  # [E]

    keep_rate = 0.7
    new_idxs, new_vals, n_kept, shape = sp_adj_drop_edge(
        idxs, vals, keep_rate, seed=0, dense_shape=(num_nodes, num_nodes))

    jax.block_until_ready((new_idxs, new_vals, n_kept))

    # sanity: kept values are original / keepRate, dropped slots are zero / -1
    nk = int(n_kept)
    assert 0 <= nk <= E
    assert bool(jnp.all(new_vals[nk:] == 0.0))
    assert bool(jnp.all(new_idxs[:, nk:] == -1))
    assert bool(jnp.all(new_idxs[:, :nk] >= 0))
    # kept (row, col, val*keepRate) triples must come from the original edge set
    orig = set(zip([int(r) for r in rows], [int(c) for c in cols],
                   [round(float(v), 5) for v in vals]))
    for j in range(nk):
        t = (int(new_idxs[0, j]), int(new_idxs[1, j]),
             round(float(new_vals[j] * keep_rate), 5))
        assert t in orig

    print("KERNEL_OK")
</pallas_src>

<mosaic_0001>
module attributes {stable_mosaic.version = 11 : i64} {
  func.func @_dropedge_kernel(%arg0: i32, %arg1: memref<2xi32, #tpu.memory_space<smem>>, %arg2: memref<8x128xf32, #tpu.memory_space<vmem>>, %arg3: memref<8x128xi32, #tpu.memory_space<vmem>>, %arg4: memref<8x128xi32, #tpu.memory_space<vmem>>, %arg5: memref<8x128xf32, #tpu.memory_space<vmem>>, %arg6: memref<8x128xi32, #tpu.memory_space<vmem>>, %arg7: memref<8x128xi32, #tpu.memory_space<vmem>>) attributes {dimension_semantics = [#tpu.dimension_semantics<parallel>], iteration_bounds = array<i64: 1>, scalar_prefetch = 1 : i64, scratch_operands = 0 : i64, tpu.core_type = #tpu.core_type<tc>, window_params = [{transform_indices = @transform_0, window_bounds = array<i64: 8, 128>}, {transform_indices = @transform_1, window_bounds = array<i64: 8, 128>}, {transform_indices = @transform_2, window_bounds = array<i64: 8, 128>}, {transform_indices = @transform_3, window_bounds = array<i64: 8, 128>}, {transform_indices = @transform_4, window_bounds = array<i64: 8, 128>}, {transform_indices = @transform_5, window_bounds = array<i64: 8, 128>}]} {
    %c0 = arith.constant 0 : index
    %0 = memref.load %arg1[%c0] : memref<2xi32, #tpu.memory_space<smem>>
    %c1 = arith.constant 1 : index
    %1 = memref.load %arg1[%c1] : memref<2xi32, #tpu.memory_space<smem>>
    %c1024_i32 = arith.constant 1024 : i32
    %2 = arith.muli %arg0, %c1024_i32 : i32
    %3 = tpu.iota {dimensions = array<i32: 0>} : vector<8x128xi32>
    %4 = tpu.iota {dimensions = array<i32: 1>} : vector<8x128xi32>
    %c128_i32 = arith.constant 128 : i32
    %5 = vector.broadcast %c128_i32 : i32 to vector<8x128xi32>
    %6 = arith.muli %3, %5 : vector<8x128xi32>
    %7 = vector.broadcast %2 : i32 to vector<8x128xi32>
    %8 = arith.addi %7, %6 : vector<8x128xi32>
    %9 = arith.addi %8, %4 : vector<8x128xi32>
    %10 = vector.broadcast %1 : i32 to vector<8x128xi32>
    %11 = arith.cmpi slt, %9, %10 : vector<8x128xi32>
    %c-1640531527_i32 = arith.constant -1640531527 : i32
    %12 = arith.muli %0, %c-1640531527_i32 : i32
    %13 = vector.broadcast %12 : i32 to vector<8x128xi32>
    %14 = arith.addi %9, %13 : vector<8x128xi32>
    %c16_i32 = arith.constant 16 : i32
    %15 = vector.broadcast %c16_i32 : i32 to vector<8x128xi32>
    %16 = arith.shrui %14, %15 : vector<8x128xi32>
    %17 = arith.xori %14, %16 : vector<8x128xi32>
    %c-2048144789_i32 = arith.constant -2048144789 : i32
    %18 = vector.broadcast %c-2048144789_i32 : i32 to vector<8x128xi32>
    %19 = arith.muli %17, %18 : vector<8x128xi32>
    %c13_i32 = arith.constant 13 : i32
    %20 = vector.broadcast %c13_i32 : i32 to vector<8x128xi32>
    %21 = arith.shrui %19, %20 : vector<8x128xi32>
    %22 = arith.xori %19, %21 : vector<8x128xi32>
    %c-1028477387_i32 = arith.constant -1028477387 : i32
    %23 = vector.broadcast %c-1028477387_i32 : i32 to vector<8x128xi32>
    %24 = arith.muli %22, %23 : vector<8x128xi32>
    %c16_i32_0 = arith.constant 16 : i32
    %25 = vector.broadcast %c16_i32_0 : i32 to vector<8x128xi32>
    %26 = arith.shrui %24, %25 : vector<8x128xi32>
    %27 = arith.xori %24, %26 : vector<8x128xi32>
    %c-1288490189_i32 = arith.constant -1288490189 : i32
    %28 = vector.broadcast %c-1288490189_i32 : i32 to vector<8x128xi32>
    %29 = arith.cmpi ult, %27, %28 : vector<8x128xi32>
    %30 = arith.andi %29, %11 : vector<8x128xi1>
    %c0_1 = arith.constant 0 : index
    %c0_2 = arith.constant 0 : index
    %31 = vector.load %arg2[%c0_1, %c0_2] : memref<8x128xf32, #tpu.memory_space<vmem>>, vector<8x128xf32>
    %cst = arith.constant 1.42857146 : f32
    %32 = vector.broadcast %cst : f32 to vector<8x128xf32>
    %33 = arith.mulf %31, %32 : vector<8x128xf32>
    %cst_3 = arith.constant 0.000000e+00 : f32
    %34 = vector.broadcast %cst_3 : f32 to vector<8x128xf32>
    %35 = arith.select %30, %33, %34 : vector<8x128xi1>, vector<8x128xf32>
    %c0_4 = arith.constant 0 : index
    %c0_5 = arith.constant 0 : index
    %36 = vector.load %arg5[%c0_4, %c0_5] : memref<8x128xf32, #tpu.memory_space<vmem>>, vector<8x128xf32>
    tpu.vector_store %arg5[%c0_4, %c0_5], %35 {strides = array<i32>} : memref<8x128xf32, #tpu.memory_space<vmem>>, vector<8x128xf32>,
    %c0_6 = arith.constant 0 : index
    %c0_7 = arith.constant 0 : index
    %37 = vector.load %arg3[%c0_6, %c0_7] : memref<8x128xi32, #tpu.memory_space<vmem>>, vector<8x128xi32>
    %c-1_i32 = arith.constant -1 : i32
    %38 = vector.broadcast %c-1_i32 : i32 to vector<8x128xi32>
    %39 = arith.select %30, %37, %38 : vector<8x128xi1>, vector<8x128xi32>
    %c0_8 = arith.constant 0 : index
    %c0_9 = arith.constant 0 : index
    %40 = vector.load %arg6[%c0_8, %c0_9] : memref<8x128xi32, #tpu.memory_space<vmem>>, vector<8x128xi32>
    tpu.vector_store %arg6[%c0_8, %c0_9], %39 {strides = array<i32>} : memref<8x128xi32, #tpu.memory_space<vmem>>, vector<8x128xi32>,
    %c0_10 = arith.constant 0 : index
    %c0_11 = arith.constant 0 : index
    %41 = vector.load %arg4[%c0_10, %c0_11] : memref<8x128xi32, #tpu.memory_space<vmem>>, vector<8x128xi32>
    %c-1_i32_12 = arith.constant -1 : i32
    %42 = vector.broadcast %c-1_i32_12 : i32 to vector<8x128xi32>
    %43 = arith.select %30, %41, %42 : vector<8x128xi1>, vector<8x128xi32>
    %c0_13 = arith.constant 0 : index
    %c0_14 = arith.constant 0 : index
    %44 = vector.load %arg7[%c0_13, %c0_14] : memref<8x128xi32, #tpu.memory_space<vmem>>, vector<8x128xi32>
    tpu.vector_store %arg7[%c0_13, %c0_14], %43 {strides = array<i32>} : memref<8x128xi32, #tpu.memory_space<vmem>>, vector<8x128xi32>,
    return
  }
  func.func @transform_0(%arg0: i32, %arg1: memref<2xi32, #tpu.memory_space<smem>>) -> (i32, i32) {
    %c0_i32 = arith.constant 0 : i32
    %c0_i32_0 = arith.constant 0 : i32
    return %arg0, %c0_i32 : i32, i32
  }
  func.func @transform_1(%arg0: i32, %arg1: memref<2xi32, #tpu.memory_space<smem>>) -> (i32, i32) {
    %c0_i32 = arith.constant 0 : i32
    %c0_i32_0 = arith.constant 0 : i32
    return %arg0, %c0_i32 : i32, i32
  }
  func.func @transform_2(%arg0: i32, %arg1: memref<2xi32, #tpu.memory_space<smem>>) -> (i32, i32) {
    %c0_i32 = arith.constant 0 : i32
    %c0_i32_0 = arith.constant 0 : i32
    return %arg0, %c0_i32 : i32, i32
  }
  func.func @transform_3(%arg0: i32, %arg1: memref<2xi32, #tpu.memory_space<smem>>) -> (i32, i32) {
    %c0_i32 = arith.constant 0 : i32
    %c0_i32_0 = arith.constant 0 : i32
    return %arg0, %c0_i32 : i32, i32
  }
  func.func @transform_4(%arg0: i32, %arg1: memref<2xi32, #tpu.memory_space<smem>>) -> (i32, i32) {
    %c0_i32 = arith.constant 0 : i32
    %c0_i32_0 = arith.constant 0 : i32
    return %arg0, %c0_i32 : i32, i32
  }
  func.func @transform_5(%arg0: i32, %arg1: memref<2xi32, #tpu.memory_space<smem>>) -> (i32, i32) {
    %c0_i32 = arith.constant 0 : i32
    %c0_i32_0 = arith.constant 0 : i32
    return %arg0, %c0_i32 : i32, i32
  }
}

</mosaic_0001>

<llo_original>
// kernel: tpu_custom_call.1
$region0: #{tpu_custom_call.1}
  #allocation0 [shape = 'u32[]', space=smem, size = 0x4, offset = 0x4, fixed_abs, tag = 'smem constant byte address 0x4 - core index']
  #allocation1 [shape = 'u32[144,128]{1,0:T(1,128)}', space=vmem, size = 0x12000, scoped, tag = 'internal scratch']
  #allocation2 [shape = 's32[1]{0}', space=sflag, size = 0x4, scoped, tag = 'scoped memory for tpu_custom_call.1']
  #allocation3 [shape = 'u8[512]{0}', space=smem, size = 0x200, scoped, tag = 'prefetched SMEM operand 0']
  %s0 = inlined_call_operand.hbm [shape: s32[2], index: 0, kind: input, shape index: {}]
  %s1 = inlined_call_operand.hbm [shape: f32[8,128], index: 1, kind: input, shape index: {}]
  %s2 = inlined_call_operand.hbm [shape: s32[8,128], index: 2, kind: input, shape index: {}]
  %s3 = inlined_call_operand.vmem [shape: s32[8,128], index: 3, kind: input, shape index: {}]
  %s4 = inlined_call_operand.hbm [shape: f32[8,128], index: 4, kind: output, shape index: {0}]
  %s5 = inlined_call_operand.hbm [shape: s32[8,128], index: 5, kind: output, shape index: {1}]
  %s6 = inlined_call_operand.hbm [shape: s32[8,128], index: 6, kind: output, shape index: {2}]
  %7 = xla_tuple %s4, %s5, %s6
  %s8 = sld [smem:[#allocation0]]
  $region46: #{tpu_custom_call.1} parent=0
    _
  %s10 = ssub.s32 1, %s8
  %s11 = scalar_select 0, %s10, %s8
  %13 = dma.hbm_to_smem %s0, 16, [#allocation3], [#allocation2]
  %14 = dma.done [#allocation2], 16
  %15 = sfence
  $region1: #{tpu_custom_call.1} parent=0
    #allocation4 [shape = 'u8[4096]{0}', space=vmem, size = 0x1000, scoped, tag = 'input window, operand 1, single buffered']
    #allocation5 [shape = 's32[1]{0}', space=sflag, size = 0x4, scoped, tag = 'scoped memory for tpu_custom_call.1']
    #allocation6 [shape = 's32[1]{0}', space=sflag, size = 0x4, scoped, tag = 'scoped memory for tpu_custom_call.1']
    #allocation7 [shape = 'u8[4096]{0}', space=vmem, size = 0x1000, scoped, tag = 'input window, operand 2, single buffered']
    #allocation8 [shape = 's32[1]{0}', space=sflag, size = 0x4, scoped, tag = 'scoped memory for tpu_custom_call.1']
    #allocation9 [shape = 'u8[4096]{0}', space=vmem, size = 0x1000, scoped, tag = 'output window, operand 0, single buffered']
    #allocation10 [shape = 'u8[4096]{0}', space=vmem, size = 0x1000, scoped, tag = 'output window, operand 1, single buffered']
    #allocation11 [shape = 's32[1]{0}', space=sflag, size = 0x4, scoped, tag = 'scoped memory for tpu_custom_call.1']
    #allocation12 [shape = 'u8[4096]{0}', space=vmem, size = 0x1000, scoped, tag = 'output window, operand 2, single buffered']
    %16 = vsyncpa [#allocation5], 0
    %17 = vsyncpa [#allocation8], 0
    %18 = vsyncpa [#allocation6], 0
    %19 = vsyncpa [#allocation11], 0
    // Predicated region
    $region2: #{tpu_custom_call.1} parent=1 // pred_check
      _
    $region3: #{tpu_custom_call.1} parent=1 // pred_check_branch
      %21 = sbr.rel (0) target = $region5
    $region4: #{tpu_custom_call.1} parent=1 // pred_region
      %s23 = ssub.s32 128, 128
      %24 = vsyncadd [#allocation5], %s23
      %s26 = sshll.u32 [#allocation4], 4
      %s27 = int_to_ptr.vmem [resolvable:$true] %s26
      %29 = dma.hbm_to_vmem [thread:$0]  %s1, 128, %s27, [#allocation5]
    $region5: #{tpu_custom_call.1} parent=1 // pred_fallthru
      _
    // Predicated region
    $region6: #{tpu_custom_call.1} parent=1 // pred_check
      _
    $region7: #{tpu_custom_call.1} parent=1 // pred_check_branch
      %31 = sbr.rel (0) target = $region9
    $region8: #{tpu_custom_call.1} parent=1 // pred_region
      %s33 = ssub.s32 128, 128
      %34 = vsyncadd [#allocation8], %s33
      %s36 = sshll.u32 [#allocation7], 4
      %s37 = int_to_ptr.vmem [resolvable:$true] %s36
      %39 = dma.hbm_to_vmem [thread:$0]  %s2, 128, %s37, [#allocation8]
    $region9: #{tpu_custom_call.1} parent=1 // pred_fallthru
      _
    // Predicated region
    $region10: #{tpu_custom_call.1} parent=1 // pred_check
      _
    $region11: #{tpu_custom_call.1} parent=1 // pred_check_branch
      %41 = sbr.rel (0) target = $region13
    $region12: #{tpu_custom_call.1} parent=1 // pred_region
      _
    $region13: #{tpu_custom_call.1} parent=1 // pred_fallthru
      _
    // Predicated region
    $region14: #{tpu_custom_call.1} parent=1 // pred_check
      _
    $region15: #{tpu_custom_call.1} parent=1 // pred_check_branch
      %43 = sbr.rel (0) target = $region17
    $region16: #{tpu_custom_call.1} parent=1 // pred_region
      %44 = dma.done [#allocation5], 128
    $region17: #{tpu_custom_call.1} parent=1 // pred_fallthru
      _
    // Predicated region
    $region18: #{tpu_custom_call.1} parent=1 // pred_check
      _
    $region19: #{tpu_custom_call.1} parent=1 // pred_check_branch
      %46 = sbr.rel (0) target = $region21
    $region20: #{tpu_custom_call.1} parent=1 // pred_region
      %47 = dma.done [#allocation8], 128
    $region21: #{tpu_custom_call.1} parent=1 // pred_fallthru
      _
    %s48 = sld [smem:[#allocation3]]
    %s49 = sld [smem:[#allocation3 + $0x1]]
    %s50 = smul.u32 0, 1024
    %v51 = vlaneseq
    %v52 = vshrl.u32 %v51, 7
    %v53 = vlaneseq
    %v54 = vand.u32 %v53, 127
    %v55 = vmul.u32 %v52, 128
    %v56 = vstv %s50
    %v57 = vadd.s32 %v56, %v55
    %v58 = vadd.s32 %v57, %v54
    %v59 = vstv %s49
    %vm60 = vcmp.lt.s32.totalorder %v58, %v59
    %s61 = smul.u32 %s48, 2654435769
    %v62 = vstv %s61
    %v63 = vadd.s32 %v58, %v62
    %v64 = vshrl.u32 %v63, 16
    %v65 = vxor.u32 %v63, %v64
    %v66 = vmul.u32 %v65, 2246822507
    %v67 = vshrl.u32 %v66, 13
    %v68 = vxor.u32 %v66, %v67
    %v69 = vmul.u32 %v68, 3266489909
    %v70 = vshrl.u32 %v69, 16
    %v71 = vxor.u32 %v69, %v70
    %vm72 = vcmp.lt.u32.totalorder %v71, 3006477107
    %vm73 = vmand %vm72, %vm60
    %v74 = vld [vmem:[#allocation4] sm:$0xff]
    %v75 = vmul.f32 %v74, 1.4285715
    %v76 = vsel %vm73, %v75, 0.0
    %77 = vst [vmem:[#allocation9] sm:$0xff] %v76
    %v78 = vld [vmem:[#allocation7] sm:$0xff]
    %v79 = vsel %vm73, %v78, 4294967295
    %80 = vst [vmem:[#allocation10] sm:$0xff] %v79
    %v81 = vld [vmem:[%s3] sm:$0xff]
    %v82 = vsel %vm73, %v81, 4294967295
    %83 = vst [vmem:[#allocation12] sm:$0xff] %v82
    // Predicated region
    $region22: #{tpu_custom_call.1} parent=1 // pred_check
      _
    $region23: #{tpu_custom_call.1} parent=1 // pred_check_branch
      %85 = sbr.rel (0) target = $region25
    $region24: #{tpu_custom_call.1} parent=1 // pred_region
      %s87 = ssub.s32 128, 128
      %88 = vsyncadd [#allocation6], %s87
      %s90 = sshll.u32 [#allocation9], 4
      %s91 = int_to_ptr.vmem [resolvable:$true] %s90
      %93 = dma.vmem_to_hbm [thread:$0]  %s91, 128, %s4, [#allocation6]
    $region25: #{tpu_custom_call.1} parent=1 // pred_fallthru
      _
    // Predicated region
    $region26: #{tpu_custom_call.1} parent=1 // pred_check
      _
    $region27: #{tpu_custom_call.1} parent=1 // pred_check_branch
      %95 = sbr.rel (0) target = $region29
    $region28: #{tpu_custom_call.1} parent=1 // pred_region
      %s97 = ssub.s32 128, 128
      %98 = vsyncadd [#allocation11], %s97
      %s100 = sshll.u32 [#allocation10], 4
      %s101 = int_to_ptr.vmem [resolvable:$true] %s100
      %103 = dma.vmem_to_hbm [thread:$0]  %s101, 128, %s5, [#allocation11]
    $region29: #{tpu_custom_call.1} parent=1 // pred_fallthru
      _
    // Predicated region
    $region30: #{tpu_custom_call.1} parent=1 // pred_check
      _
    $region31: #{tpu_custom_call.1} parent=1 // pred_check_branch
      %105 = sbr.rel (0) target = $region33
    $region32: #{tpu_custom_call.1} parent=1 // pred_region
      %s107 = ssub.s32 128, 128
      %108 = vsyncadd [#allocation11], %s107
      %s110 = sshll.u32 [#allocation12], 4
      %s111 = int_to_ptr.vmem [resolvable:$true] %s110
      %113 = dma.vmem_to_hbm [thread:$0]  %s111, 128, %s6, [#allocation11]
    $region33: #{tpu_custom_call.1} parent=1 // pred_fallthru
      _
    // Predicated region
    $region34: #{tpu_custom_call.1} parent=1 // pred_check
      _
    $region35: #{tpu_custom_call.1} parent=1 // pred_check_branch
      %115 = sbr.rel (0) target = $region37
    $region36: #{tpu_custom_call.1} parent=1 // pred_region
      %116 = dma.done [#allocation6], 128
    $region37: #{tpu_custom_call.1} parent=1 // pred_fallthru
      _
    // Predicated region
    $region38: #{tpu_custom_call.1} parent=1 // pred_check
      _
    $region39: #{tpu_custom_call.1} parent=1 // pred_check_branch
      %118 = sbr.rel (0) target = $region41
    $region40: #{tpu_custom_call.1} parent=1 // pred_region
      %119 = dma.done [#allocation11], 128
    $region41: #{tpu_custom_call.1} parent=1 // pred_fallthru
      _
    // Predicated region
    $region42: #{tpu_custom_call.1} parent=1 // pred_check
      _
    $region43: #{tpu_custom_call.1} parent=1 // pred_check_branch
      %121 = sbr.rel (0) target = $region45
    $region44: #{tpu_custom_call.1} parent=1 // pred_region
      %122 = dma.done [#allocation11], 128
    $region45: #{tpu_custom_call.1} parent=1 // pred_fallthru
      _
    %123 = vsyncpa [#allocation5], 1
    %124 = vsyncpa [#allocation8], 1
    %125 = vsyncpa [#allocation6], 1
    %126 = vsyncpa [#allocation11], 1

</llo_original>
